<compile_context>
chip_gen: v7x
topology: tpu7x:2x2x1
jax: 0.10.0
libtpu: 0.0.40
codegen_flags: <defaults>
</compile_context>

<pallas_src>
import jax
import jax.numpy as jnp
from jax.experimental import pallas as pl
from jax.experimental.pallas import tpu as pltpu

# Small synthetic config (consistent with the module: n_ctx context tokens,
# ctx_dim text width, vis_dim visual width, ctx_depth = 1 as in __init__).
N_CTX = 8
CTX_DIM = 32
VIS_DIM = 32
HIDDEN = 16
CTX_DEPTH = 1

LANES = 128                      # lane-dense padding width
HEADS_OUT = CTX_DIM + VIS_DIM    # fused text|vis head output width (64)

# --- packed parameter slab row layout (all rows 128 lanes wide, f32) --------
# 8-aligned row offsets; total 64 rows = 32 KiB (was 176 rows / ~90 KiB).
W1_ROW0 = 0                       # rows [0, 32)  : w1  [ctx_dim, hidden] in cols 0:HIDDEN
WH_ROW0 = W1_ROW0 + CTX_DIM       # rows [32, 48) : [wt|wv] [hidden, 64]  in cols 0:HEADS_OUT
B1_ROW0 = WH_ROW0 + HIDDEN        # row 48        : b1 in cols 0:HIDDEN
BH_ROW0 = B1_ROW0 + 8             # row 56        : [bt|bv] in cols 0:HEADS_OUT
P_ROWS = BH_ROW0 + 8              # 64 rows total


def _meta_net_kernel(x_ref, p_ref, out_ref):
    """Fused PromptTranslator forward on one depth tile.

    x_ref:   [d_tile, n_ctx, ctx_dim]   input context embeddings
    p_ref:   [P_ROWS, 128]              packed parameter slab (resident)
    out_ref: [d_tile, n_ctx, 128]       lane-dense output (text | vis | pad)
    """
    dt, n_ctx, ctx_dim = x_ref.shape
    lanes = out_ref.shape[-1]

    # Fold depth into the matmul M dimension: one trunk + one head matmul.
    x = x_ref[...].reshape(dt * n_ctx, ctx_dim).astype(jnp.bfloat16)

    # Trunk: x @ w1 + b1, ReLU.  bf16 operands, f32 accumulation.
    w1 = p_ref[W1_ROW0:W1_ROW0 + CTX_DIM, :].astype(jnp.bfloat16)   # [32, 128]
    b1 = p_ref[B1_ROW0:B1_ROW0 + 1, :]                               # [1, 128] f32
    h = jnp.dot(x, w1, preferred_element_type=jnp.float32) + b1
    h = jnp.maximum(h, 0.0)                                          # [M, 128] f32

    # Fused text|vis head, K = HIDDEN (16) instead of 128.
    wh = p_ref[WH_ROW0:WH_ROW0 + HIDDEN, :].astype(jnp.bfloat16)     # [16, 128]
    bh = p_ref[BH_ROW0:BH_ROW0 + 1, :]                                # [1, 128] f32
    out = jnp.dot(h[:, :HIDDEN].astype(jnp.bfloat16), wh,
                  preferred_element_type=jnp.float32) + bh           # [M, 128]

    out_ref[...] = out.reshape(dt, n_ctx, lanes).astype(out_ref.dtype)


def init_params(key, ctx_dim=CTX_DIM, vis_dim=VIS_DIM, hidden=HIDDEN,
                dtype=jnp.float32):
    """Deterministic synthetic parameters for the meta_net (PromptTranslator)."""
    k1, k2, k3 = jax.random.split(key, 3)
    std = 0.02
    return {
        "w1": (jax.random.normal(k1, (ctx_dim, hidden)) * std).astype(dtype),
        "b1": jnp.zeros((hidden,), dtype),
        "wt": (jax.random.normal(k2, (hidden, ctx_dim)) * std).astype(dtype),
        "bt": jnp.zeros((ctx_dim,), dtype),
        "wv": (jax.random.normal(k3, (hidden, vis_dim)) * std).astype(dtype),
        "bv": jnp.zeros((vis_dim,), dtype),
    }


def pack_params(params):
    """Pack all meta_net params into one lane-dense [P_ROWS, 128] f32 slab.

    Done once (init-time), so the forward pass issues a single parameter DMA
    that stays resident in VMEM across all grid steps.
    """
    slab = jnp.zeros((P_ROWS, LANES), jnp.float32)
    slab = slab.at[W1_ROW0:W1_ROW0 + CTX_DIM, 0:HIDDEN].set(
        params["w1"].astype(jnp.float32))
    slab = slab.at[WH_ROW0:WH_ROW0 + HIDDEN, 0:CTX_DIM].set(
        params["wt"].astype(jnp.float32))
    slab = slab.at[WH_ROW0:WH_ROW0 + HIDDEN, CTX_DIM:HEADS_OUT].set(
        params["wv"].astype(jnp.float32))
    slab = slab.at[B1_ROW0, 0:HIDDEN].set(params["b1"].astype(jnp.float32))
    slab = slab.at[BH_ROW0, 0:CTX_DIM].set(params["bt"].astype(jnp.float32))
    slab = slab.at[BH_ROW0, CTX_DIM:HEADS_OUT].set(params["bv"].astype(jnp.float32))
    return slab


def _choose_d_tile(depth, n_ctx):
    """Depth slices per grid step: target M ~ 256 rows, keep >= 2 steps (v7x)."""
    target_rows = 256                                   # 128 already saturates v5e's MXU rows
    d_tile = max(1, min(depth, target_rows // max(n_ctx, 1)))
    if depth > 1:
        d_tile = min(d_tile, pl.cdiv(depth, 2))          # >= 2 grid steps for 2 TCs
    while depth % d_tile:                                 # make it divide depth evenly
        d_tile -= 1
    return d_tile


def tpg_prompt_learner_forward(context_emb, param_slab):
    """Equivalent of TPGPromptLearner.forward(context_emb).

    context_emb: [n_ctx, ctx_dim]  (the PyTorch `.unsqueeze(0)` is applied here)
                 or [depth, n_ctx, ctx_dim] if already batched / ctx_depth > 1.
    Returns:
      text_ctx: [depth, n_ctx, ctx_dim]
      vis_ctx:  [depth, n_ctx, vis_dim]
    """
    x = context_emb[None] if context_emb.ndim == 2 else context_emb
    depth, n_ctx, ctx_dim = x.shape
    out_dtype = context_emb.dtype

    d_tile = _choose_d_tile(depth, n_ctx)
    grid_steps = depth // d_tile

    m_total = depth * n_ctx
    flops = 2 * m_total * ctx_dim * LANES + 2 * m_total * HIDDEN * LANES
    bytes_accessed = (x.size * x.dtype.itemsize
                      + param_slab.size * param_slab.dtype.itemsize
                      + m_total * LANES * jnp.dtype(out_dtype).itemsize)
    cost = pl.CostEstimate(flops=flops, transcendentals=0,
                           bytes_accessed=bytes_accessed)
    out_shape = jax.ShapeDtypeStruct((depth, n_ctx, LANES), out_dtype)

    if grid_steps == 1:
        # depth == 1 (the module's ctx_depth = 1): single block, no grid axis —
        # the kernel here is pure fixed overhead, so drop the grid machinery.
        out = pl.pallas_call(
            _meta_net_kernel,
            out_shape=out_shape,
            in_specs=[pl.BlockSpec((depth, n_ctx, ctx_dim), lambda: (0, 0, 0)),
                      pl.BlockSpec((P_ROWS, LANES), lambda: (0, 0))],
            out_specs=pl.BlockSpec((depth, n_ctx, LANES), lambda: (0, 0, 0)),
            cost_estimate=cost,
        )(x, param_slab)
    else:
        out = pl.pallas_call(
            _meta_net_kernel,
            out_shape=out_shape,
            grid=(grid_steps,),
            in_specs=[
                pl.BlockSpec((d_tile, n_ctx, ctx_dim), lambda d: (d, 0, 0)),
                # Constant block index -> slab DMA'd once, resident across the
                # (parallel) depth grid axis.
                pl.BlockSpec((P_ROWS, LANES), lambda d: (0, 0)),
            ],
            out_specs=pl.BlockSpec((d_tile, n_ctx, LANES), lambda d: (d, 0, 0)),
            compiler_params=pltpu.CompilerParams(
                dimension_semantics=("parallel",)),
            cost_estimate=cost,
        )(x, param_slab)

    # Static slices (glue, outside the kernel): text in lanes 0:32, vis 32:64.
    text_ctx = out[:, :, :CTX_DIM]
    vis_ctx = out[:, :, CTX_DIM:CTX_DIM + VIS_DIM]
    return text_ctx, vis_ctx


def _reference_forward(x, params):
    """Pure-JAX reference for correctness checking (x: [depth, n_ctx, ctx_dim])."""
    h = jnp.maximum(jnp.einsum("dnc,ch->dnh", x, params["w1"]) + params["b1"], 0.0)
    text = jnp.einsum("dnh,hc->dnc", h, params["wt"]) + params["bt"]
    vis = jnp.einsum("dnh,hv->dnv", h, params["wv"]) + params["bv"]
    return text, vis


if __name__ == "__main__":
    key = jax.random.PRNGKey(0)
    k_params, k_x1, k_x2 = jax.random.split(key, 3)

    params = init_params(k_params)
    param_slab = pack_params(params)

    # Case 1: the module's actual configuration (ctx_depth = 1, no-grid path).
    context_emb = jax.random.normal(k_x1, (N_CTX, CTX_DIM), dtype=jnp.float32)
    text_ctx, vis_ctx = tpg_prompt_learner_forward(context_emb, param_slab)
    jax.block_until_ready((text_ctx, vis_ctx))

    ref_text, ref_vis = _reference_forward(context_emb[None], params)
    assert text_ctx.shape == (CTX_DEPTH, N_CTX, CTX_DIM)
    assert vis_ctx.shape == (CTX_DEPTH, N_CTX, VIS_DIM)
    assert jnp.allclose(text_ctx, ref_text, atol=1e-3, rtol=1e-2)
    assert jnp.allclose(vis_ctx, ref_vis, atol=1e-3, rtol=1e-2)

    # Case 2: batched / deeper context — exercises the D_TILE fold + 2-step
    # parallel grid path (both v7x TensorCores get work).
    depth = 16
    x_batched = jax.random.normal(k_x2, (depth, N_CTX, CTX_DIM), dtype=jnp.float32)
    text_b, vis_b = tpg_prompt_learner_forward(x_batched, param_slab)
    jax.block_until_ready((text_b, vis_b))

    ref_tb, ref_vb = _reference_forward(x_batched, params)
    assert text_b.shape == (depth, N_CTX, CTX_DIM)
    assert vis_b.shape == (depth, N_CTX, VIS_DIM)
    assert jnp.allclose(text_b, ref_tb, atol=1e-3, rtol=1e-2)
    assert jnp.allclose(vis_b, ref_vb, atol=1e-3, rtol=1e-2)

    print("KERNEL_OK")
</pallas_src>

<mosaic_0001>
module attributes {stable_mosaic.version = 11 : i64} {
  func.func @_meta_net_kernel(%arg0: memref<1x8x32xf32, #tpu.memory_space<vmem>>, %arg1: memref<64x128xf32, #tpu.memory_space<vmem>>, %arg2: memref<1x8x128xf32, #tpu.memory_space<vmem>>) attributes {dimension_semantics = [], scalar_prefetch = 0 : i64, scratch_operands = 0 : i64, tpu.core_type = #tpu.core_type<tc>} {
    %c0 = arith.constant 0 : index
    %c0_0 = arith.constant 0 : index
    %c0_1 = arith.constant 0 : index
    %0 = vector.load %arg0[%c0, %c0_0, %c0_1] : memref<1x8x32xf32, #tpu.memory_space<vmem>>, vector<1x8x32xf32>
    %1 = vector.shape_cast %0 : vector<1x8x32xf32> to vector<8x32xf32>
    %2 = arith.truncf %1 : vector<8x32xf32> to vector<8x32xbf16>
    %c0_2 = arith.constant 0 : index
    %c0_3 = arith.constant 0 : index
    %3 = vector.load %arg1[%c0_2, %c0_3] : memref<64x128xf32, #tpu.memory_space<vmem>>, vector<32x128xf32>
    %4 = arith.truncf %3 : vector<32x128xf32> to vector<32x128xbf16>
    %c48 = arith.constant 48 : index
    %c0_4 = arith.constant 0 : index
    %5 = vector.load %arg1[%c48, %c0_4] : memref<64x128xf32, #tpu.memory_space<vmem>>, vector<1x128xf32>
    %cst = arith.constant dense<0.000000e+00> : vector<8x128xf32>
    %6 = tpu.matmul %2, %4, %cst {dimension_numbers = #tpu.dot_dimension_numbers<[1], [0], [0], [1], [0, 0, 1, 1], [], []>} : vector<8x32xbf16>, vector<32x128xbf16>, vector<8x128xf32> -> vector<8x128xf32>
    %7 = vector.broadcast %5 : vector<1x128xf32> to vector<8x128xf32>
    %8 = arith.addf %6, %7 : vector<8x128xf32>
    %cst_5 = arith.constant 0.000000e+00 : f32
    %9 = vector.broadcast %cst_5 : f32 to vector<8x128xf32>
    %10 = arith.maximumf %8, %9 : vector<8x128xf32>
    %c32 = arith.constant 32 : index
    %c0_6 = arith.constant 0 : index
    %11 = vector.load %arg1[%c32, %c0_6] : memref<64x128xf32, #tpu.memory_space<vmem>>, vector<16x128xf32>
    %12 = arith.truncf %11 : vector<16x128xf32> to vector<16x128xbf16>
    %c56 = arith.constant 56 : index
    %c0_7 = arith.constant 0 : index
    %13 = vector.load %arg1[%c56, %c0_7] : memref<64x128xf32, #tpu.memory_space<vmem>>, vector<1x128xf32>
    %14 = vector.extract_strided_slice %10 {offsets = [0, 0], sizes = [8, 16], strides = [1, 1]} : vector<8x128xf32> to vector<8x16xf32>
    %15 = arith.truncf %14 : vector<8x16xf32> to vector<8x16xbf16>
    %cst_8 = arith.constant dense<0.000000e+00> : vector<8x128xf32>
    %16 = tpu.matmul %15, %12, %cst_8 {dimension_numbers = #tpu.dot_dimension_numbers<[1], [0], [0], [1], [0, 0, 1, 1], [], []>} : vector<8x16xbf16>, vector<16x128xbf16>, vector<8x128xf32> -> vector<8x128xf32>
    %17 = vector.broadcast %13 : vector<1x128xf32> to vector<8x128xf32>
    %18 = arith.addf %16, %17 : vector<8x128xf32>
    %19 = vector.shape_cast %18 : vector<8x128xf32> to vector<1x8x128xf32>
    %c0_9 = arith.constant 0 : index
    %c0_10 = arith.constant 0 : index
    %c0_11 = arith.constant 0 : index
    %20 = vector.load %arg2[%c0_9, %c0_10, %c0_11] : memref<1x8x128xf32, #tpu.memory_space<vmem>>, vector<1x8x128xf32>
    tpu.vector_store %arg2[%c0_9, %c0_10, %c0_11], %19 {strides = array<i32>} : memref<1x8x128xf32, #tpu.memory_space<vmem>>, vector<1x8x128xf32>,
    return
  }
}

</mosaic_0001>

<llo_original>
// kernel: tpu_custom_call.1
$region0: #{tpu_custom_call.1}
  #allocation0 [shape = 'u32[]', space=smem, size = 0x4, offset = 0x4, fixed_abs, tag = 'smem constant byte address 0x4 - core index']
  #allocation1 [shape = 'u32[144,128]{1,0:T(1,128)}', space=vmem, size = 0x12000, scoped, tag = 'internal scratch']
  %s0 = inlined_call_operand.hbm [shape: f32[1,8,32], index: 0, kind: input, shape index: {}]
  %s1 = inlined_call_operand.hbm [shape: f32[64,128], index: 1, kind: input, shape index: {}]
  %s2 = inlined_call_operand.hbm [shape: f32[1,8,128], index: 2, kind: output, shape index: {}]
  %s3 = sld [smem:[#allocation0]]
  $region26: #{tpu_custom_call.1} parent=0
    _
  %s5 = ssub.s32 1, %s3
  %s6 = scalar_select 0, %s5, %s3
  $region1: #{tpu_custom_call.1} parent=0
    #allocation2 [shape = 'u8[4096]{0}', space=vmem, size = 0x1000, scoped, tag = 'input window, operand 0, single buffered']
    #allocation3 [shape = 's32[1]{0}', space=sflag, size = 0x4, scoped, tag = 'scoped memory for tpu_custom_call.1']
    #allocation4 [shape = 's32[1]{0}', space=sflag, size = 0x4, scoped, tag = 'scoped memory for tpu_custom_call.1']
    #allocation5 [shape = 'u8[32768]{0}', space=vmem, size = 0x8000, scoped, tag = 'input window, operand 1, single buffered']
    #allocation6 [shape = 's32[1]{0}', space=sflag, size = 0x4, scoped, tag = 'scoped memory for tpu_custom_call.1']
    #allocation7 [shape = 'u8[4096]{0}', space=vmem, size = 0x1000, scoped, tag = 'output window, operand 0, single buffered']
    %7 = vsyncpa [#allocation3], 0
    %8 = vsyncpa [#allocation6], 0
    %9 = vsyncpa [#allocation4], 0
    // Predicated region
    $region2: #{tpu_custom_call.1} parent=1 // pred_check
      _
    $region3: #{tpu_custom_call.1} parent=1 // pred_check_branch
      %11 = sbr.rel (0) target = $region5
    $region4: #{tpu_custom_call.1} parent=1 // pred_region
      %s13 = ssub.s32 128, 128
      %14 = vsyncadd [#allocation3], %s13
      %s16 = sshll.u32 [#allocation2], 4
      %s17 = int_to_ptr.vmem [resolvable:$true] %s16
      %19 = dma.hbm_to_vmem [thread:$0]  %s0, 128, %s17, [#allocation3]
    $region5: #{tpu_custom_call.1} parent=1 // pred_fallthru
      _
    // Predicated region
    $region6: #{tpu_custom_call.1} parent=1 // pred_check
      _
    $region7: #{tpu_custom_call.1} parent=1 // pred_check_branch
      %21 = sbr.rel (0) target = $region9
    $region8: #{tpu_custom_call.1} parent=1 // pred_region
      %s23 = ssub.s32 1024, 1024
      %24 = vsyncadd [#allocation6], %s23
      %s25 = sshll.u32 [#allocation5], 4
      %s26 = int_to_ptr.vmem [resolvable:$true] %s25
      %31 = dma.hbm_to_vmem [thread:$0]  %s1, 1024, %s26, [#allocation6], 128, 128, 8
    $region9: #{tpu_custom_call.1} parent=1 // pred_fallthru
      _
    // Predicated region
    $region10: #{tpu_custom_call.1} parent=1 // pred_check
      _
    $region11: #{tpu_custom_call.1} parent=1 // pred_check_branch
      %33 = sbr.rel (0) target = $region13
    $region12: #{tpu_custom_call.1} parent=1 // pred_region
      %34 = dma.done [#allocation3], 128
    $region13: #{tpu_custom_call.1} parent=1 // pred_fallthru
      _
    // Predicated region
    $region14: #{tpu_custom_call.1} parent=1 // pred_check
      _
    $region15: #{tpu_custom_call.1} parent=1 // pred_check_branch
      %36 = sbr.rel (0) target = $region17
    $region16: #{tpu_custom_call.1} parent=1 // pred_region
      %37 = dma.done [#allocation6], 1024
    $region17: #{tpu_custom_call.1} parent=1 // pred_fallthru
      _
    %v39 = vld [vmem:[#allocation2] sm:$0xff]
    %v40 = vpack.c.bf16 %v39, %v39
    %v41 = vld [vmem:[#allocation5] sm:$0xff]
    %v42 = vld [vmem:[#allocation5 + $0x8] sm:$0xff]
    %v43 = vld [vmem:[#allocation5 + $0x10] sm:$0xff]
    %v44 = vld [vmem:[#allocation5 + $0x18] sm:$0xff]
    %v45 = vpack.c.bf16 %v42, %v41
    %v46 = vpack.c.bf16 %v44, %v43
    %v47 = vld [vmem:[#allocation5 + $0x30] sm:$0x1]
    %v48 = vlaneseq
    %v49 = vshrl.u32 %v48, 7
    %v50 = vsub.s32 0, %v49
    %v51 = vrot.slane %v47, %v50
    %vm52 = vcmask 261120
    %v54 = vsel %vm52, %v40, 0
    %56 = vmatprep.subr.bf16.mxu0 0
    %57 = vmatpush1.bf16.msra.mxu0 %v45
    %58 = vmatprep.subr.bf16.mxu0 0
    %59 = vmatpush1.bf16.msra.mxu0 %v46
    %60 = vmatprep.subr.bf16.mxu0 0
    %61 = vmatpush1.bf16.msra.mxu0 0
    %62 = vmatprep.subr.bf16.mxu0 0
    %63 = vmatpush1.bf16.msra.mxu0 0
    %64 = vmatprep.subr.bf16.mxu0 0
    %65 = vmatpush1.bf16.msra.mxu0 0
    %66 = vmatprep.subr.bf16.mxu0 0
    %67 = vmatpush1.bf16.msra.mxu0 0
    %68 = vmatprep.subr.bf16.mxu0 0
    %69 = vmatpush1.bf16.msra.mxu0 0
    %70 = vmatprep.subr.bf16.mxu0 0
    %71 = vmatpush1.bf16.msra.mxu0 0
    %72 = vmatprep.subr.bf16.mxu0 0
    %73 = vmatpush1.bf16.msra.mxu0 0
    %74 = vmatprep.subr.bf16.mxu0 0
    %75 = vmatpush1.bf16.msra.mxu0 0
    %76 = vmatprep.subr.bf16.mxu0 0
    %77 = vmatpush1.bf16.msra.mxu0 0
    %78 = vmatprep.subr.bf16.mxu0 0
    %79 = vmatpush1.bf16.msra.mxu0 0
    %80 = vmatprep.subr.bf16.mxu0 0
    %81 = vmatpush1.bf16.msra.mxu0 0
    %82 = vmatprep.subr.bf16.mxu0 0
    %83 = vmatpush1.bf16.msra.mxu0 0
    %84 = vmatprep.subr.bf16.mxu0 0
    %85 = vmatpush1.bf16.msra.mxu0 0
    %86 = vmatprep.subr.bf16.mxu0 0
    %87 = vmatpush1.bf16.msra.mxu0 0
    %88 = vmatprep.mubr.bf16.mxu0 0
    %89 = vmatmul.mubr.bf16.gmra.mrb[0].mxu0 %v54
    %v90 = vpop.f32.mrb[0].mxu0
    %v91 = vadd.f32 %v51, %v90
    %v92 = vpop.f32.mrb[0].mxu0
    %v93 = vpop.f32.mrb[0].mxu0
    %v94 = vpop.f32.mrb[0].mxu0
    %95 = vdwg.mxu0
    %v96 = vmax.f32 %v91, 0.0
    %v97 = vld [vmem:[#allocation5 + $0x20] sm:$0xff]
    %v98 = vld [vmem:[#allocation5 + $0x28] sm:$0xff]
    %v99 = vpack.c.bf16 %v98, %v97
    %v100 = vld [vmem:[#allocation5 + $0x38] sm:$0x1]
    %v101 = vpack.c.bf16 %v96, %v96
    %v102 = vlaneseq
    %v103 = vshrl.u32 %v102, 7
    %v104 = vsub.s32 0, %v103
    %v105 = vrot.slane %v100, %v104
    %vm106 = vcmask 130048
    %v108 = vsel %vm106, %v101, 0
    %110 = vmatprep.subr.bf16.mxu0 0
    %111 = vmatpush1.bf16.msra.mxu0 %v99
    %112 = vmatprep.subr.bf16.mxu0 0
    %113 = vmatpush1.bf16.msra.mxu0 0
    %114 = vmatprep.subr.bf16.mxu0 0
    %115 = vmatpush1.bf16.msra.mxu0 0
    %116 = vmatprep.subr.bf16.mxu0 0
    %117 = vmatpush1.bf16.msra.mxu0 0
    %118 = vmatprep.subr.bf16.mxu0 0
    %119 = vmatpush1.bf16.msra.mxu0 0
    %120 = vmatprep.subr.bf16.mxu0 0
    %121 = vmatpush1.bf16.msra.mxu0 0
    %122 = vmatprep.subr.bf16.mxu0 0
    %123 = vmatpush1.bf16.msra.mxu0 0
    %124 = vmatprep.subr.bf16.mxu0 0
    %125 = vmatpush1.bf16.msra.mxu0 0
    %126 = vmatprep.subr.bf16.mxu0 0
    %127 = vmatpush1.bf16.msra.mxu0 0
    %128 = vmatprep.subr.bf16.mxu0 0
    %129 = vmatpush1.bf16.msra.mxu0 0
    %130 = vmatprep.subr.bf16.mxu0 0
    %131 = vmatpush1.bf16.msra.mxu0 0
    %132 = vmatprep.subr.bf16.mxu0 0
    %133 = vmatpush1.bf16.msra.mxu0 0
    %134 = vmatprep.subr.bf16.mxu0 0
    %135 = vmatpush1.bf16.msra.mxu0 0
    %136 = vmatprep.subr.bf16.mxu0 0
    %137 = vmatpush1.bf16.msra.mxu0 0
    %138 = vmatprep.subr.bf16.mxu0 0
    %139 = vmatpush1.bf16.msra.mxu0 0
    %140 = vmatprep.subr.bf16.mxu0 0
    %141 = vmatpush1.bf16.msra.mxu0 0
    %142 = vmatprep.mubr.bf16.mxu0 0
    %143 = vmatmul.mubr.bf16.gmra.mrb[0].mxu0 %v108
    %v144 = vpop.f32.mrb[0].mxu0
    %v145 = vadd.f32 %v105, %v144
    %v146 = vpop.f32.mrb[0].mxu0
    %v147 = vpop.f32.mrb[0].mxu0
    %v148 = vpop.f32.mrb[0].mxu0
    %149 = vdwg.mxu0
    %150 = vst [vmem:[#allocation7] sm:$0xff] %v145
    // Predicated region
    $region18: #{tpu_custom_call.1} parent=1 // pred_check
      _
    $region19: #{tpu_custom_call.1} parent=1 // pred_check_branch
      %152 = sbr.rel (0) target = $region21
    $region20: #{tpu_custom_call.1} parent=1 // pred_region
      %s154 = ssub.s32 128, 128
      %155 = vsyncadd [#allocation4], %s154
      %s157 = sshll.u32 [#allocation7], 4
      %s158 = int_to_ptr.vmem [resolvable:$true] %s157
      %160 = dma.vmem_to_hbm [thread:$0]  %s158, 128, %s2, [#allocation4]
    $region21: #{tpu_custom_call.1} parent=1 // pred_fallthru
      _
    // Predicated region
    $region22: #{tpu_custom_call.1} parent=1 // pred_check
      _
    $region23: #{tpu_custom_call.1} parent=1 // pred_check_branch
      %162 = sbr.rel (0) target = $region25
    $region24: #{tpu_custom_call.1} parent=1 // pred_region
      %163 = dma.done [#allocation4], 128
    $region25: #{tpu_custom_call.1} parent=1 // pred_fallthru
      _
    %164 = vsyncpa [#allocation3], 1
    %165 = vsyncpa [#allocation6], 1
    %166 = vsyncpa [#allocation4], 1

</llo_original>
